<compile_context>
chip_gen: v6e
topology: v6e:2x2x1
jax: 0.10.0
libtpu: 0.0.40
codegen_flags: <defaults>
</compile_context>

<pallas_src>
import functools

import numpy as np
import jax
import jax.numpy as jnp
from jax import lax
from jax.experimental import pallas as pl
from jax.experimental.pallas import tpu as pltpu


def _round_up(x, m):
    return ((x + m - 1) // m) * m


def _vmem_capacity_bytes():
    """Physical per-core VMEM; conservative fallback is safe on every generation."""
    try:
        cap = int(pltpu.get_tpu_info().vmem_capacity_bytes)
        if cap > 0:
            return cap
    except Exception:
        pass
    return 64 * 1024 * 1024          # v7x has the smallest VMEM (64 MiB)


def _pick_tile(n_pos, halo, cin_pad, cout, k_pad, vmem_budget):
    """Largest lane-tile (multiple of `halo`, itself a multiple of 128) whose
    working set fits the VMEM budget; capped so the grid keeps >= 2 steps."""
    in_b, out_b = 2, 4                                     # bf16 operands, f32 output
    resident = cout * k_pad * in_b + cout * out_b          # weight + bias (single buffer)

    def working_set(t):
        stream = 2 * cin_pad * t * in_b + 2 * cin_pad * halo * in_b   # double-buffered strips
        stream += 2 * cout * t * out_b                                # double-buffered output
        scratch = cin_pad * (t + halo) * in_b + k_pad * t * in_b + cout * t * 4
        return resident + stream + scratch

    cap = max(halo, min(_round_up(pl.cdiv(n_pos, 2), halo), 8192))
    tile = halo
    t = halo
    while t <= cap:
        if working_set(t) <= vmem_budget:
            tile = t
        t += halo
    return tile


def _conv_bn_relu_kernel(w_ref, b_ref, xa_ref, xb_ref, o_ref, *, relu, tap_offsets, tile):
    """One pixel-strip of the fused conv (+ folded BN) (+ ReLU).

    w_ref  : (Cout, K_pad)     bf16 folded weight, K_pad = kh*kw*Cin_pad
    b_ref  : (Cout, 1)         f32 folded BN bias
    xa_ref : (Cin_pad, TILE)   bf16 flat input strip for this tile
    xb_ref : (Cin_pad, HALO)   bf16 look-ahead strip (halo for the taps)
    o_ref  : (Cout, TILE)      f32 output strip (lane-dense)
    """
    win = jnp.concatenate([xa_ref[...], xb_ref[...]], axis=1)      # (Cin_pad, TILE+HALO)
    # In-kernel im2col: stack the kh*kw shifted taps (static VMEM slices) into
    # one (K_pad, TILE) patch so the conv is a single lane-dense MXU matmul.
    patch = jnp.concatenate([win[:, off:off + tile] for off in tap_offsets], axis=0)
    acc = jnp.dot(w_ref[...], patch, preferred_element_type=jnp.float32)
    acc = acc + b_ref[...]                                          # per-channel bias
    if relu:
        acc = jnp.maximum(acc, 0.0)
    o_ref[...] = acc.astype(o_ref.dtype)


def conv_bn_relu(x_nchw, weight, bn_gamma, bn_beta, bn_mean, bn_var,
                 *, stride=1, padding=1, relu=True, eps=1e-5):
    """NCHW in / NCHW out wrapper around the fused Pallas kernel."""
    x = x_nchw.astype(jnp.float32)
    N, Cin, H, W = x.shape
    Cout, _, kh, kw = weight.shape
    Ho = (H + 2 * padding - kh) // stride + 1
    Wo = (W + 2 * padding - kw) // stride + 1
    Hp, Wp = H + 2 * padding, W + 2 * padding

    cin_pad = _round_up(Cin, 16)               # bf16 sublane-tile friendly
    k_pad = kh * kw * cin_pad

    # ---- fold inference BatchNorm into the conv weight and a bias ----------
    scale = bn_gamma / jnp.sqrt(bn_var + eps)                         # (Cout,)
    bias = (bn_beta - bn_mean * scale)[:, None].astype(jnp.float32)   # (Cout, 1)
    w_f = weight.astype(jnp.float32) * scale[:, None, None, None]     # (Cout,Cin,kh,kw)
    w_f = jnp.transpose(w_f, (0, 2, 3, 1))                            # (Cout,kh,kw,Cin), tap-major
    w_f = jnp.pad(w_f, ((0, 0), (0, 0), (0, 0), (0, cin_pad - Cin)))
    w_folded = w_f.reshape(Cout, k_pad).astype(jnp.bfloat16)

    # ---- channel-major flat input (layout only; kernel reads it ~once) -----
    xp = jnp.pad(x, ((0, 0), (0, cin_pad - Cin),
                     (padding, padding), (padding, padding)))          # (N,Cin_pad,Hp,Wp)
    x_flat = jnp.transpose(xp, (1, 0, 2, 3)).reshape(cin_pad, N * Hp * Wp)
    x_flat = x_flat.astype(jnp.bfloat16)

    # Tap offsets into the per-image flattened (Hp, Wp) grid (dense, stride-1).
    tap_offsets = tuple(dy * Wp + dx for dy in range(kh) for dx in range(kw))
    halo = _round_up(max(max(tap_offsets), 1), 128)

    n_pos = N * Hp * Wp                         # dense output positions
    vmem_cap = _vmem_capacity_bytes()
    tile = _pick_tile(n_pos, halo, cin_pad, Cout, k_pad, int(vmem_cap * 0.4))
    num_tiles = pl.cdiv(n_pos, tile)
    l_pad = num_tiles * tile + halo             # covers the last tile's halo
    x_flat = jnp.pad(x_flat, ((0, 0), (0, l_pad - n_pos)))

    kernel = functools.partial(_conv_bn_relu_kernel, relu=relu,
                               tap_offsets=tap_offsets, tile=tile)
    cost = pl.CostEstimate(
        flops=int(2 * Cout * k_pad * num_tiles * tile),
        bytes_accessed=int(cin_pad * l_pad * 2 + num_tiles * cin_pad * halo * 2
                           + Cout * k_pad * 2 + Cout * 4
                           + Cout * num_tiles * tile * 4),
        transcendentals=0)

    def build_call(single_buffer_consts):
        const_kw = dict(pipeline_mode=pl.Buffered(1)) if single_buffer_consts else {}
        hb = tile // halo          # tile is a multiple of halo by construction
        return pl.pallas_call(
            kernel,
            out_shape=jax.ShapeDtypeStruct((Cout, num_tiles * tile), jnp.float32),
            grid_spec=pltpu.PrefetchScalarGridSpec(
                num_scalar_prefetch=0,
                grid=(num_tiles,),
                in_specs=[
                    pl.BlockSpec((Cout, k_pad), lambda j: (0, 0), **const_kw),   # weight (resident)
                    pl.BlockSpec((Cout, 1), lambda j: (0, 0), **const_kw),       # bias (resident)
                    pl.BlockSpec((cin_pad, tile), lambda j: (0, j)),             # input strip
                    pl.BlockSpec((cin_pad, halo), lambda j: (0, (j + 1) * hb)),  # halo strip
                ],
                out_specs=pl.BlockSpec((Cout, tile), lambda j: (0, j)),
            ),
            compiler_params=pltpu.CompilerParams(
                dimension_semantics=("parallel",),          # shards across v7x's 2 TCs
                vmem_limit_bytes=int(vmem_cap * 0.7)),
            cost_estimate=cost,
        )

    try:
        out_flat = build_call(True)(w_folded, bias, x_flat, x_flat)
    except Exception:
        # Fallback if this JAX build rejects pipeline_mode=pl.Buffered(1).
        out_flat = build_call(False)(w_folded, bias, x_flat, x_flat)

    # Valid outputs live at dense positions (n, oy*stride, ox*stride) on the
    # padded (Hp, Wp) grid; junk columns/rows are sliced away here.
    dense = out_flat[:, :n_pos].reshape(Cout, N, Hp, Wp)
    out = dense[:, :, 0:(Ho - 1) * stride + 1:stride, 0:(Wo - 1) * stride + 1:stride]
    # NOTE: when chaining fused ConvBNRelu stages, consume `out_flat`/`dense`
    # (channel-major flat layout) directly and skip this NCHW transpose.
    return jnp.transpose(out, (1, 0, 2, 3))


# ---------------------------- pure-JAX reference -----------------------------
def conv_bn_relu_reference(x_nchw, weight, gamma, beta, mean, var,
                           *, stride, padding, relu, eps=1e-5):
    hp = lax.Precision.HIGHEST
    y = lax.conv_general_dilated(
        x_nchw.astype(jnp.float32), weight.astype(jnp.float32),
        window_strides=(stride, stride),
        padding=((padding, padding), (padding, padding)),
        dimension_numbers=("NCHW", "OIHW", "NCHW"), precision=hp)
    scale = (gamma / jnp.sqrt(var + eps))[None, :, None, None]
    bias = (beta - mean * gamma / jnp.sqrt(var + eps))[None, :, None, None]
    y = y * scale + bias
    if relu:
        y = jnp.maximum(y, 0.0)
    return y


if __name__ == "__main__":
    key = jax.random.PRNGKey(0)
    kx, kw_, kg, kb, km, kv = jax.random.split(key, 6)

    # ConvBNRelu(in_channels=4, out_channels=16, kernel_size=3, ...)
    N, Cin, H, W = 2, 4, 16, 16
    Cout, kh, kw = 16, 3, 3

    x = jax.random.normal(kx, (N, Cin, H, W), jnp.float32)
    weight = 0.2 * jax.random.normal(kw_, (Cout, Cin, kh, kw), jnp.float32)
    gamma = 1.0 + 0.1 * jax.random.normal(kg, (Cout,), jnp.float32)
    beta = 0.1 * jax.random.normal(kb, (Cout,), jnp.float32)
    mean = 0.05 * jax.random.normal(km, (Cout,), jnp.float32)
    var = 1.0 + 0.1 * jax.random.uniform(kv, (Cout,), jnp.float32)

    configs = [
        dict(stride=1, padding=1, relu=True),
        dict(stride=1, padding=1, relu=False),
        dict(stride=2, padding=1, relu=True),   # swrn downsampling ConvBNRelu
    ]
    for cfg in configs:
        out = jax.block_until_ready(
            conv_bn_relu(x, weight, gamma, beta, mean, var, **cfg))
        ref = jax.block_until_ready(
            conv_bn_relu_reference(x, weight, gamma, beta, mean, var, **cfg))
        # bf16 conv operands with f32 accumulation -> slightly looser tolerance.
        np.testing.assert_allclose(np.asarray(out), np.asarray(ref),
                                   rtol=2e-2, atol=2e-2)

    print("KERNEL_OK")
</pallas_src>

<mosaic_0001>
module attributes {stable_mosaic.version = 11 : i64} {
  func.func @_conv_bn_relu_kernel(%arg0: i32, %arg1: memref<16x144xbf16, #tpu.memory_space<vmem>>, %arg2: memref<16x1xf32, #tpu.memory_space<vmem>>, %arg3: memref<16x384xbf16, #tpu.memory_space<vmem>>, %arg4: memref<16x128xbf16, #tpu.memory_space<vmem>>, %arg5: memref<16x384xf32, #tpu.memory_space<vmem>>) attributes {dimension_semantics = [#tpu.dimension_semantics<parallel>], iteration_bounds = array<i64: 2>, scalar_prefetch = 0 : i64, scratch_operands = 0 : i64, tpu.core_type = #tpu.core_type<tc>, window_params = [{pipeline_mode = #tpu.pipeline_mode<synchronous>, transform_indices = @transform_0, window_bounds = array<i64: 16, 144>}, {pipeline_mode = #tpu.pipeline_mode<synchronous>, transform_indices = @transform_1, window_bounds = array<i64: 16, 1>}, {transform_indices = @transform_2, window_bounds = array<i64: 16, 384>}, {transform_indices = @transform_3, window_bounds = array<i64: 16, 128>}, {transform_indices = @transform_4, window_bounds = array<i64: 16, 384>}]} {
    %c0 = arith.constant 0 : index
    %c0_0 = arith.constant 0 : index
    %0 = vector.load %arg3[%c0, %c0_0] : memref<16x384xbf16, #tpu.memory_space<vmem>>, vector<16x384xbf16>
    %c0_1 = arith.constant 0 : index
    %c0_2 = arith.constant 0 : index
    %1 = vector.load %arg4[%c0_1, %c0_2] : memref<16x128xbf16, #tpu.memory_space<vmem>>, vector<16x128xbf16>
    %2 = tpu.concatenate %0, %1 in 1 : vector<16x384xbf16>, vector<16x128xbf16> -> vector<16x512xbf16>
    %3 = vector.extract_strided_slice %2 {offsets = [0, 0], sizes = [16, 384], strides = [1, 1]} : vector<16x512xbf16> to vector<16x384xbf16>
    %4 = vector.extract_strided_slice %2 {offsets = [0, 1], sizes = [16, 384], strides = [1, 1]} : vector<16x512xbf16> to vector<16x384xbf16>
    %5 = vector.extract_strided_slice %2 {offsets = [0, 2], sizes = [16, 384], strides = [1, 1]} : vector<16x512xbf16> to vector<16x384xbf16>
    %6 = vector.extract_strided_slice %2 {offsets = [0, 18], sizes = [16, 384], strides = [1, 1]} : vector<16x512xbf16> to vector<16x384xbf16>
    %7 = vector.extract_strided_slice %2 {offsets = [0, 19], sizes = [16, 384], strides = [1, 1]} : vector<16x512xbf16> to vector<16x384xbf16>
    %8 = vector.extract_strided_slice %2 {offsets = [0, 20], sizes = [16, 384], strides = [1, 1]} : vector<16x512xbf16> to vector<16x384xbf16>
    %9 = vector.extract_strided_slice %2 {offsets = [0, 36], sizes = [16, 384], strides = [1, 1]} : vector<16x512xbf16> to vector<16x384xbf16>
    %10 = vector.extract_strided_slice %2 {offsets = [0, 37], sizes = [16, 384], strides = [1, 1]} : vector<16x512xbf16> to vector<16x384xbf16>
    %11 = vector.extract_strided_slice %2 {offsets = [0, 38], sizes = [16, 384], strides = [1, 1]} : vector<16x512xbf16> to vector<16x384xbf16>
    %12 = tpu.concatenate %3, %4, %5, %6, %7, %8, %9, %10, %11 in 0 : vector<16x384xbf16>, vector<16x384xbf16>, vector<16x384xbf16>, vector<16x384xbf16>, vector<16x384xbf16>, vector<16x384xbf16>, vector<16x384xbf16>, vector<16x384xbf16>, vector<16x384xbf16> -> vector<144x384xbf16>
    %c0_3 = arith.constant 0 : index
    %c0_4 = arith.constant 0 : index
    %13 = vector.load %arg1[%c0_3, %c0_4] : memref<16x144xbf16, #tpu.memory_space<vmem>>, vector<16x144xbf16>
    %cst = arith.constant dense<0.000000e+00> : vector<16x384xf32>
    %14 = tpu.matmul %13, %12, %cst {dimension_numbers = #tpu.dot_dimension_numbers<[1], [0], [0], [1], [0, 0, 1, 1], [], []>} : vector<16x144xbf16>, vector<144x384xbf16>, vector<16x384xf32> -> vector<16x384xf32>
    %c0_5 = arith.constant 0 : index
    %c0_6 = arith.constant 0 : index
    %15 = vector.load %arg2[%c0_5, %c0_6] : memref<16x1xf32, #tpu.memory_space<vmem>>, vector<16x1xf32>
    %16 = vector.broadcast %15 : vector<16x1xf32> to vector<16x384xf32>
    %17 = arith.addf %14, %16 : vector<16x384xf32>
    %cst_7 = arith.constant 0.000000e+00 : f32
    %18 = vector.broadcast %cst_7 : f32 to vector<16x384xf32>
    %19 = arith.maximumf %17, %18 : vector<16x384xf32>
    %c0_8 = arith.constant 0 : index
    %c0_9 = arith.constant 0 : index
    %20 = vector.load %arg5[%c0_8, %c0_9] : memref<16x384xf32, #tpu.memory_space<vmem>>, vector<16x384xf32>
    tpu.vector_store %arg5[%c0_8, %c0_9], %19 {strides = array<i32>} : memref<16x384xf32, #tpu.memory_space<vmem>>, vector<16x384xf32>,
    return
  }
  func.func @transform_0(%arg0: i32) -> (i32, i32) {
    %c0_i32 = arith.constant 0 : i32
    %c0_i32_0 = arith.constant 0 : i32
    %c0_i32_1 = arith.constant 0 : i32
    return %c0_i32, %c0_i32_0 : i32, i32
  }
  func.func @transform_1(%arg0: i32) -> (i32, i32) {
    %c0_i32 = arith.constant 0 : i32
    %c0_i32_0 = arith.constant 0 : i32
    %c0_i32_1 = arith.constant 0 : i32
    return %c0_i32, %c0_i32_0 : i32, i32
  }
  func.func @transform_2(%arg0: i32) -> (i32, i32) {
    %c0_i32 = arith.constant 0 : i32
    %c0_i32_0 = arith.constant 0 : i32
    return %c0_i32, %arg0 : i32, i32
  }
  func.func @transform_3(%arg0: i32) -> (i32, i32) {
    %c1_i32 = arith.constant 1 : i32
    %0 = arith.addi %arg0, %c1_i32 : i32
    %c3_i32 = arith.constant 3 : i32
    %1 = arith.muli %0, %c3_i32 : i32
    %c0_i32 = arith.constant 0 : i32
    %c0_i32_0 = arith.constant 0 : i32
    return %c0_i32, %1 : i32, i32
  }
  func.func @transform_4(%arg0: i32) -> (i32, i32) {
    %c0_i32 = arith.constant 0 : i32
    %c0_i32_0 = arith.constant 0 : i32
    return %c0_i32, %arg0 : i32, i32
  }
}

module attributes {stable_mosaic.version = 11 : i64} {
  func.func @_conv_bn_relu_kernel(%arg0: i32, %arg1: memref<16x144xbf16, #tpu.memory_space<vmem>>, %arg2: memref<16x1xf32, #tpu.memory_space<vmem>>, %arg3: memref<16x384xbf16, #tpu.memory_space<vmem>>, %arg4: memref<16x128xbf16, #tpu.memory_space<vmem>>, %arg5: memref<16x384xf32, #tpu.memory_space<vmem>>) attributes {dimension_semantics = [#tpu.dimension_semantics<parallel>], iteration_bounds = array<i64: 2>, scalar_prefetch = 0 : i64, scratch_operands = 0 : i64, tpu.core_type = #tpu.core_type<tc>, window_params = [{pipeline_mode = #tpu.pipeline_mode<synchronous>, transform_indices = @transform_0, window_bounds = array<i64: 16, 144>}, {pipeline_mode = #tpu.pipeline_mode<synchronous>, transform_indices = @transform_1, window_bounds = array<i64: 16, 1>}, {transform_indices = @transform_2, window_bounds = array<i64: 16, 384>}, {transform_indices = @transform_3, window_bounds = array<i64: 16, 128>}, {transform_indices = @transform_4, window_bounds = array<i64: 16, 384>}]} {
    %c0 = arith.constant 0 : index
    %c0_0 = arith.constant 0 : index
    %0 = vector.load %arg3[%c0, %c0_0] : memref<16x384xbf16, #tpu.memory_space<vmem>>, vector<16x384xbf16>
    %c0_1 = arith.constant 0 : index
    %c0_2 = arith.constant 0 : index
    %1 = vector.load %arg4[%c0_1, %c0_2] : memref<16x128xbf16, #tpu.memory_space<vmem>>, vector<16x128xbf16>
    %2 = tpu.concatenate %0, %1 in 1 : vector<16x384xbf16>, vector<16x128xbf16> -> vector<16x512xbf16>
    %3 = vector.extract_strided_slice %2 {offsets = [0, 0], sizes = [16, 384], strides = [1, 1]} : vector<16x512xbf16> to vector<16x384xbf16>
    %4 = vector.extract_strided_slice %2 {offsets = [0, 1], sizes = [16, 384], strides = [1, 1]} : vector<16x512xbf16> to vector<16x384xbf16>
    %5 = vector.extract_strided_slice %2 {offsets = [0, 2], sizes = [16, 384], strides = [1, 1]} : vector<16x512xbf16> to vector<16x384xbf16>
    %6 = vector.extract_strided_slice %2 {offsets = [0, 18], sizes = [16, 384], strides = [1, 1]} : vector<16x512xbf16> to vector<16x384xbf16>
    %7 = vector.extract_strided_slice %2 {offsets = [0, 19], sizes = [16, 384], strides = [1, 1]} : vector<16x512xbf16> to vector<16x384xbf16>
    %8 = vector.extract_strided_slice %2 {offsets = [0, 20], sizes = [16, 384], strides = [1, 1]} : vector<16x512xbf16> to vector<16x384xbf16>
    %9 = vector.extract_strided_slice %2 {offsets = [0, 36], sizes = [16, 384], strides = [1, 1]} : vector<16x512xbf16> to vector<16x384xbf16>
    %10 = vector.extract_strided_slice %2 {offsets = [0, 37], sizes = [16, 384], strides = [1, 1]} : vector<16x512xbf16> to vector<16x384xbf16>
    %11 = vector.extract_strided_slice %2 {offsets = [0, 38], sizes = [16, 384], strides = [1, 1]} : vector<16x512xbf16> to vector<16x384xbf16>
    %12 = tpu.concatenate %3, %4, %5, %6, %7, %8, %9, %10, %11 in 0 : vector<16x384xbf16>, vector<16x384xbf16>, vector<16x384xbf16>, vector<16x384xbf16>, vector<16x384xbf16>, vector<16x384xbf16>, vector<16x384xbf16>, vector<16x384xbf16>, vector<16x384xbf16> -> vector<144x384xbf16>
    %c0_3 = arith.constant 0 : index
    %c0_4 = arith.constant 0 : index
    %13 = vector.load %arg1[%c0_3, %c0_4] : memref<16x144xbf16, #tpu.memory_space<vmem>>, vector<16x144xbf16>
    %cst = arith.constant dense<0.000000e+00> : vector<16x384xf32>
    %14 = tpu.matmul %13, %12, %cst {dimension_numbers = #tpu.dot_dimension_numbers<[1], [0], [0], [1], [0, 0, 1, 1], [], []>} : vector<16x144xbf16>, vector<144x384xbf16>, vector<16x384xf32> -> vector<16x384xf32>
    %c0_5 = arith.constant 0 : index
    %c0_6 = arith.constant 0 : index
    %15 = vector.load %arg2[%c0_5, %c0_6] : memref<16x1xf32, #tpu.memory_space<vmem>>, vector<16x1xf32>
    %16 = vector.broadcast %15 : vector<16x1xf32> to vector<16x384xf32>
    %17 = arith.addf %14, %16 : vector<16x384xf32>
    %cst_7 = arith.constant 0.000000e+00 : f32
    %18 = vector.broadcast %cst_7 : f32 to vector<16x384xf32>
    %19 = arith.maximumf %17, %18 : vector<16x384xf32>
    %c0_8 = arith.constant 0 : index
    %c0_9 = arith.constant 0 : index
    %20 = vector.load %arg5[%c0_8, %c0_9] : memref<16x384xf32, #tpu.memory_space<vmem>>, vector<16x384xf32>
    tpu.vector_store %arg5[%c0_8, %c0_9], %19 {strides = array<i32>} : memref<16x384xf32, #tpu.memory_space<vmem>>, vector<16x384xf32>,
    return
  }
  func.func @transform_0(%arg0: i32) -> (i32, i32) {
    %c0_i32 = arith.constant 0 : i32
    %c0_i32_0 = arith.constant 0 : i32
    %c0_i32_1 = arith.constant 0 : i32
    return %c0_i32, %c0_i32_0 : i32, i32
  }
  func.func @transform_1(%arg0: i32) -> (i32, i32) {
    %c0_i32 = arith.constant 0 : i32
    %c0_i32_0 = arith.constant 0 : i32
    %c0_i32_1 = arith.constant 0 : i32
    return %c0_i32, %c0_i32_0 : i32, i32
  }
  func.func @transform_2(%arg0: i32) -> (i32, i32) {
    %c0_i32 = arith.constant 0 : i32
    %c0_i32_0 = arith.constant 0 : i32
    return %c0_i32, %arg0 : i32, i32
  }
  func.func @transform_3(%arg0: i32) -> (i32, i32) {
    %c1_i32 = arith.constant 1 : i32
    %0 = arith.addi %arg0, %c1_i32 : i32
    %c3_i32 = arith.constant 3 : i32
    %1 = arith.muli %0, %c3_i32 : i32
    %c0_i32 = arith.constant 0 : i32
    %c0_i32_0 = arith.constant 0 : i32
    return %c0_i32, %1 : i32, i32
  }
  func.func @transform_4(%arg0: i32) -> (i32, i32) {
    %c0_i32 = arith.constant 0 : i32
    %c0_i32_0 = arith.constant 0 : i32
    return %c0_i32, %arg0 : i32, i32
  }
}

</mosaic_0001>

<llo_original>
// kernel: tpu_custom_call.1
$region0: #{tpu_custom_call.1}
  #allocation0 [shape = 'u32[]', space=smem, size = 0x4, offset = 0x4, fixed_abs, tag = 'smem constant byte address 0x4 - core index']
  #allocation1 [shape = 'u32[144,128]{1,0:T(1,128)}', space=vmem, size = 0x12000, scoped, tag = 'internal scratch']
  %s0 = inlined_call_operand.vmem [shape: bf16[16,144], index: 0, kind: input, shape index: {}]
  %s1 = inlined_call_operand.vmem [shape: f32[16,1], index: 1, kind: input, shape index: {}]
  %s2 = inlined_call_operand.hbm [shape: bf16[16,896], index: 2, kind: input, shape index: {}]
  %s3 = inlined_call_operand.hbm [shape: bf16[16,896], index: 3, kind: input, shape index: {}]
  %s4 = inlined_call_operand.hbm [shape: f32[16,768], index: 4, kind: output, shape index: {}]
  %s5 = sld [smem:[#allocation0]]
  $region57: #{tpu_custom_call.1} parent=0
    _
  %s7 = ssub.s32 1, %s5
  %s8 = scalar_select 0, %s7, %s5
  $region1: #{tpu_custom_call.1} parent=0
    #allocation2 [shape = 'u8[24576]{0}', space=vmem, size = 0x6000, scoped, tag = 'input window, operand 2']
    #allocation3 [shape = 's32[2]{0}', space=sflag, size = 0x8, scoped, tag = 'scoped memory for tpu_custom_call.1']
    #allocation4 [shape = 's32[2]{0}', space=sflag, size = 0x8, scoped, tag = 'scoped memory for tpu_custom_call.1']
    #allocation5 [shape = 'u8[8192]{0}', space=vmem, size = 0x2000, scoped, tag = 'input window, operand 3']
    #allocation6 [shape = 's32[2]{0}', space=sflag, size = 0x8, scoped, tag = 'scoped memory for tpu_custom_call.1']
    #allocation7 [shape = 'u8[49152]{0}', space=vmem, size = 0xc000, scoped, tag = 'output window, operand 0']
    %9 = vsyncpa [#allocation3], 0
    %s10 = scalar_lea.sflag [#allocation3], 1
    %11 = vsyncpa %s10, 0
    %12 = vsyncpa [#allocation6], 0
    %s13 = scalar_lea.sflag [#allocation6], 1
    %14 = vsyncpa %s13, 0
    %15 = vsyncpa [#allocation4], 0
    %s16 = scalar_lea.sflag [#allocation4], 1
    %17 = vsyncpa %s16, 0
    loop: start=0, step=1, limit=4
    $region2: #{tpu_custom_call.1} parent=1 // loop_pre_header
      _
    $region3: #{tpu_custom_call.1} parent=1 // loop_header
      %s19 = sphi 0, %s23
      %p20 = scmp.ge.s32.totalorder %s19, 4
      %s27 = sphi 0, %s27
      %s29 = sphi 0, %s27
      %s30 = sphi 0, %s29
      %s44 = sphi 0, %s30
      %s48 = sphi 0, %s48
      %s50 = sphi 0, %s48
      %s51 = sphi 0, %s50
      %s65 = sphi 0, %s51
      %s71 = sphi 0, %s73
      %s74 = sphi 0, %s71
      %s75 = sphi 0, %s74
      %s91 = sphi 0, %s75
      %s101 = sphi 0, %s103
      %s104 = sphi 0, %s101
      %s105 = sphi 0, %s104
      %s121 = sphi 0, %s105
      %s127 = sphi 0, %s129
      %s130 = sphi 0, %s127
      %s131 = sphi 0, %s130
      %s147 = sphi 0, %s131
    $region4: #{tpu_custom_call.1} parent=1 // loop_header_branch
      %22 = sbr.rel (%p20) target = $region8
    $region5: #{tpu_custom_call.1} parent=1 // loop_body
      %s24 = ssub.s32 %s19, 1
      %s25 = ssub.s32 %s19, 2
      %s26 = sadd.s32 %s19, 1
      %s28 = sadd.s32 %s27, 1
      %p31 = scmp.eq.s32.totalorder %s19, 1
      %p32 = scmp.ne.s32.totalorder %s27, %s29
      %p33 = scmp.eq.s32.totalorder %s19, 0
      %p34 = por %p32, %p33
      %p35 = scmp.ne.s32.totalorder %s27, %s29
      %p36 = scmp.eq.s32.totalorder %s24, 1
      %p37 = por %p35, %p36
      %p38 = scmp.ne.s32.totalorder %s29, %s30
      %p39 = scmp.eq.s32.totalorder %s24, 0
      %p40 = por %p38, %p39
      %p41 = scmp.ne.s32.totalorder %s29, %s30
      %p42 = scmp.eq.s32.totalorder %s25, 1
      %p43 = por %p41, %p42
      %p45 = scmp.ne.s32.totalorder %s30, %s44
      %p46 = scmp.eq.s32.totalorder %s25, 0
      %p47 = por %p45, %p46
      %s49 = sadd.s32 %s48, 1
      %p52 = scmp.eq.s32.totalorder %s19, 1
      %p53 = scmp.ne.s32.totalorder %s48, %s50
      %p54 = scmp.eq.s32.totalorder %s19, 0
      %p55 = por %p53, %p54
      %p56 = scmp.ne.s32.totalorder %s48, %s50
      %p57 = scmp.eq.s32.totalorder %s24, 1
      %p58 = por %p56, %p57
      %p59 = scmp.ne.s32.totalorder %s50, %s51
      %p60 = scmp.eq.s32.totalorder %s24, 0
      %p61 = por %p59, %p60
      %p62 = scmp.ne.s32.totalorder %s50, %s51
      %p63 = scmp.eq.s32.totalorder %s25, 1
      %p64 = por %p62, %p63
      %p66 = scmp.ne.s32.totalorder %s51, %s65
      %p67 = scmp.eq.s32.totalorder %s25, 0
      %p68 = por %p66, %p67
      %s69 = ssub.s32 %s19, %s26
      %p70 = scmp.eq.s32.totalorder %s69, 0
      %s72 = sadd.s32 %s71, 1
      %s73 = scalar_select %p70, %s71, %s72
      %p76 = pneg %p70
      %p77 = scmp.eq.s32.totalorder %s19, 1
      %p78 = por %p76, %p77
      %p79 = scmp.ne.s32.totalorder %s71, %s74
      %p80 = scmp.eq.s32.totalorder %s19, 0
      %p81 = por %p79, %p80
      %p82 = scmp.ne.s32.totalorder %s71, %s74
      %p83 = scmp.eq.s32.totalorder %s24, 1
      %p84 = por %p82, %p83
      %p85 = scmp.ne.s32.totalorder %s74, %s75
      %p86 = scmp.eq.s32.totalorder %s24, 0
      %p87 = por %p85, %p86
      %p88 = scmp.ne.s32.totalorder %s74, %s75
      %p89 = scmp.eq.s32.totalorder %s25, 1
      %p90 = por %p88, %p89
      %p92 = scmp.ne.s32.totalorder %s75, %s91
      %p93 = scmp.eq.s32.totalorder %s25, 0
      %p94 = por %p92, %p93
      %s95 = sadd.s32 %s19, 1
      %s96 = smul.u32 %s95, 3
      %s97 = sadd.s32 %s26, 1
      %s98 = smul.u32 %s97, 3
      %s99 = ssub.s32 %s96, %s98
      %p100 = scmp.eq.s32.totalorder %s99, 0
      %s102 = sadd.s32 %s101, 1
      %s103 = scalar_select %p100, %s101, %s102
      %p106 = pneg %p100
      %p107 = scmp.eq.s32.totalorder %s19, 1
      %p108 = por %p106, %p107
      %p109 = scmp.ne.s32.totalorder %s101, %s104
      %p110 = scmp.eq.s32.totalorder %s19, 0
      %p111 = por %p109, %p110
      %p112 = scmp.ne.s32.totalorder %s101, %s104
      %p113 = scmp.eq.s32.totalorder %s24, 1
      %p114 = por %p112, %p113
      %p115 = scmp.ne.s32.totalorder %s104, %s105
      %p116 = scmp.eq.s32.totalorder %s24, 0
      %p117 = por %p115, %p116
      %p118 = scmp.ne.s32.totalorder %s104, %s105
      %p119 = scmp.eq.s32.totalorder %s25, 1
      %p120 = por %p118, %p119
      %p122 = scmp.ne.s32.totalorder %s105, %s121
      %p123 = scmp.eq.s32.totalorder %s25, 0
      %p124 = por %p122, %p123
      %s125 = ssub.s32 %s19, %s26
      %p126 = scmp.eq.s32.totalorder %s125, 0
      %s128 = sadd.s32 %s127, 1
      %s129 = scalar_select %p126, %s127, %s128
      %p132 = pneg %p126
      %p133 = scmp.eq.s32.totalorder %s19, 1
      %p134 = por %p132, %p133
      %p135 = scmp.ne.s32.totalorder %s127, %s130
      %p136 = scmp.eq.s32.totalorder %s19, 0
      %p137 = por %p135, %p136
      %p138 = scmp.ne.s32.totalorder %s127, %s130
      %p139 = scmp.eq.s32.totalorder %s24, 1
      %p140 = por %p138, %p139
      %p141 = scmp.ne.s32.totalorder %s130, %s131
      %p142 = scmp.eq.s32.totalorder %s24, 0
      %p143 = por %p141, %p142
      %p144 = scmp.ne.s32.totalorder %s130, %s131
      %p145 = scmp.eq.s32.totalorder %s25, 1
      %p146 = por %p144, %p145
      %p148 = scmp.ne.s32.totalorder %s131, %s147
      %p149 = scmp.eq.s32.totalorder %s25, 0
      %p150 = por %p148, %p149
      %p151 = scmp.le.s32.totalorder 1, %s19
      %p152 = scmp.lt.s32.totalorder %s19, 3
      %p153 = pnand %p151, %p152
      %p154 = pneg %p153
      // Predicated region
      $region9: #{tpu_custom_call.1} parent=5 // pred_check
        _
      $region10: #{tpu_custom_call.1} parent=5 // pred_check_branch
        %156 = sbr.rel (%p153) target = $region12
      $region11: #{tpu_custom_call.1} parent=5 // pred_region
        %s157 = ssub.s32 %s19, 1
        // Predicated region
        $region13: #{tpu_custom_call.1} parent=11 // pred_check
          %p158 = pneg %p40
        $region14: #{tpu_custom_call.1} parent=11 // pred_check_branch
          %160 = sbr.rel (%p158) target = $region16
        $region15: #{tpu_custom_call.1} parent=11 // pred_region
          _
        $region16: #{tpu_custom_call.1} parent=11 // pred_fallthru
          _
        // Predicated region
        $region17: #{tpu_custom_call.1} parent=11 // pred_check
          %p161 = pneg %p61
        $region18: #{tpu_custom_call.1} parent=11 // pred_check_branch
          %163 = sbr.rel (%p161) target = $region20
        $region19: #{tpu_custom_call.1} parent=11 // pred_region
          _
        $region20: #{tpu_custom_call.1} parent=11 // pred_fallthru
          _
      $region12: #{tpu_custom_call.1} parent=5 // pred_fallthru
        _
      %p164 = scmp.lt.s32.totalorder %s19, 2
      // Predicated region
      $region21: #{tpu_custom_call.1} parent=5 // pred_check
        %p165 = pneg %p164
      $region22: #{tpu_custom_call.1} parent=5 // pred_check_branch
        %167 = sbr.rel (%p165) target = $region24
      $region23: #{tpu_custom_call.1} parent=5 // pred_region
        // Predicated region
        $region25: #{tpu_custom_call.1} parent=23 // pred_check
          %p168 = pneg %p81
        $region26: #{tpu_custom_call.1} parent=23 // pred_check_branch
          %170 = sbr.rel (%p168) target = $region28
        $region27: #{tpu_custom_call.1} parent=23 // pred_region
          %s171 = sand.u32 %s71, 1
          %s172 = scalar_lea.sflag [#allocation3], %s171
          %s173 = sand.u32 %s71, 1
          %s174 = smul.addr %s173, 24
          %s175 = scalar_lea.vmem [#allocation2], %s174
          %s176 = smul.u32 3, %s19
          %s177 = ssub.s32 7, %s176
          %p178 = scmp.lt.s32.totalorder %s177, 3
          %s179 = scalar_select %p178, %s177, 3
          %s180 = smul.u32 128, %s179
          %s182 = ssub.s32 384, %s180
          %183 = vsyncadd %s172, %s182
          %p184 = scmp.ne.s32.totalorder 0, %s180
          %s185 = smul.addr %s176, 64
          %s186 = scalar_lea.hbm %s2, %s185
          %s187 = smul.u32 %s179, 4
          %s188 = smul.u32 %s187, 2
          %s189 = sshll.u32 %s175, 4
          %s190 = int_to_ptr.vmem [resolvable:$true] %s189
          %s191 = sshll.u32 %s188, 4
          %195 = dma.hbm_to_vmem [thread:$0]  (%p184), %s186, %s191, %s190, %s172, 448, 192, %s187
        $region28: #{tpu_custom_call.1} parent=23 // pred_fallthru
          _
        // Predicated region
        $region29: #{tpu_custom_call.1} parent=23 // pred_check
          %p196 = pneg %p111
        $region30: #{tpu_custom_call.1} parent=23 // pred_check_branch
          %198 = sbr.rel (%p196) target = $region32
        $region31: #{tpu_custom_call.1} parent=23 // pred_region
          %s199 = sand.u32 %s101, 1
          %s200 = scalar_lea.sflag [#allocation6], %s199
          %s201 = sand.u32 %s101, 1
          %s202 = smul.addr %s201, 8
          %s203 = scalar_lea.vmem [#allocation5], %s202
          %s204 = sadd.s32 %s19, 1
          %s205 = smul.u32 %s204, 3
          %s207 = ssub.s32 128, 128
          %208 = vsyncadd %s200, %s207
          %s209 = smul.addr %s205, 64
          %s210 = scalar_lea.hbm %s3, %s209
          %s211 = sshll.u32 %s203, 4
          %s212 = int_to_ptr.vmem [resolvable:$true] %s211
          %217 = dma.hbm_to_vmem [thread:$0]  %s210, 128, %s212, %s200, 448, 64, 4
        $region32: #{tpu_custom_call.1} parent=23 // pred_fallthru
          _
      $region24: #{tpu_custom_call.1} parent=5 // pred_fallthru
        _
      %p218 = scmp.le.s32.totalorder 1, %s19
      %p219 = scmp.lt.s32.totalorder %s19, 3
      %p220 = pnand %p218, %p219
      %p221 = pneg %p220
      // Predicated region
      $region33: #{tpu_custom_call.1} parent=5 // pred_check
        _
      $region34: #{tpu_custom_call.1} parent=5 // pred_check_branch
        %223 = sbr.rel (%p220) target = $region36
      $region35: #{tpu_custom_call.1} parent=5 // pred_region
        %s224 = ssub.s32 %s19, 1
        %s225 = sand.u32 %s74, 1
        %s226 = scalar_lea.sflag [#allocation3], %s225
        %s227 = sand.u32 %s74, 1
        %s228 = smul.addr %s227, 24
        %s229 = scalar_lea.vmem [#allocation2], %s228
        // Predicated region
        $region37: #{tpu_custom_call.1} parent=35 // pred_check
          %p230 = pneg %p87
        $region38: #{tpu_custom_call.1} parent=35 // pred_check_branch
          %232 = sbr.rel (%p230) target = $region40
        $region39: #{tpu_custom_call.1} parent=35 // pred_region
          %233 = dma.done %s226, 384
        $region40: #{tpu_custom_call.1} parent=35 // pred_fallthru
          _
        %s234 = sand.u32 %s104, 1
        %s235 = scalar_lea.sflag [#allocation6], %s234
        %s236 = sand.u32 %s104, 1
        %s237 = smul.addr %s236, 8
        %s238 = scalar_lea.vmem [#allocation5], %s237
        // Predicated region
        $region41: #{tpu_custom_call.1} parent=35 // pred_check
          %p239 = pneg %p117
        $region42: #{tpu_custom_call.1} parent=35 // pred_check_branch
          %241 = sbr.rel (%p239) target = $region44
        $region43: #{tpu_custom_call.1} parent=35 // pred_region
          %242 = dma.done %s235, 128
        $region44: #{tpu_custom_call.1} parent=35 // pred_fallthru
          _
        %p243 = pneg %p40
        %p244 = pneg %p37
        %p245 = pneg %p61
        %p246 = pneg %p58
        %s247 = sand.u32 %s74, 1
        %s248 = scalar_lea.sflag [#allocation3], %s247
        %s249 = sand.u32 %s74, 1
        %s250 = smul.addr %s249, 24
        %s251 = scalar_lea.vmem [#allocation2], %s250
        %p252 = pneg %p87
        %p253 = pneg %p84
        %s254 = sand.u32 %s104, 1
        %s255 = scalar_lea.sflag [#allocation6], %s254
        %s256 = sand.u32 %s104, 1
        %s257 = smul.addr %s256, 8
        %s258 = scalar_lea.vmem [#allocation5], %s257
        %p259 = pneg %p117
        %p260 = pneg %p114
        %p261 = pneg %p143
        %p262 = pneg %p140
        %s263 = sand.u32 %s130, 1
        %s264 = scalar_lea.sflag [#allocation4], %s263
        %s265 = sand.u32 %s130, 1
        %s266 = smul.addr %s265, 48
        %s267 = scalar_lea.vmem [#allocation7], %s266
        %s268 = smul.u32 3, %s24
        %s269 = ssub.s32 7, %s268
        %p270 = scmp.lt.s32.totalorder %s269, 3
        %s271 = scalar_select %p270, %s269, 3
        %s272 = smul.u32 128, %s271
        %s273 = sadd.s32 %s24, 1
        %s274 = smul.u32 %s273, 3
        %s275 = smul.u32 3, %s24
        %v277 = vld [vmem:[%s229] sm:$0xff]
        %v278 = vld [vmem:[%s229 + $0x8] sm:$0xf]
        %v279 = vld [vmem:[%s229 + $0xc] sm:$0xff]
        %v280 = vld [vmem:[%s229 + $0x14] sm:$0xf]
        %v281 = vld [vmem:[%s238] sm:$0xf]
        %v282 = vld [vmem:[%s238 + $0x4] sm:$0xf]
        %v287 = vunpack.c.l.b16 %v277
        %v288 = vunpack.c.h.b16 %v277
        %v289 = vunpack.c.l.b16 %v278
        %v290 = vunpack.c.l.b16 %v279
        %v291 = vunpack.c.h.b16 %v279
        %v292 = vunpack.c.l.b16 %v280
        %v293 = vpack.c.b16 %v290, %v287
        %v294 = vpack.c.b16 %v291, %v288
        %v295 = vpack.c.b16 %v292, %v289
        %v301 = vunpack.c.l.b16 %v281
        %v302 = vunpack.c.l.b16 %v282
        %v303 = vpack.c.b16 %v302, %v301
        %304 = vrot.lane.b32.xlu0 %v293, 127
        %v305 = vpop.permute.xlu0 %304
        %306 = vrot.lane.b32.xlu0 %v294, 127
        %v307 = vpop.permute.xlu0 %306
        %308 = vrot.lane.b32.xlu0 %v295, 127
        %v309 = vpop.permute.xlu0 %308
        %310 = vrot.lane.b32.xlu0 %v303, 127
        %v311 = vpop.permute.xlu0 %310
        %vm312 = vcmask 1039360
        %v313 = vsel %vm312, %v305, %v307
        %v314 = vsel %vm312, %v307, %v309
        %v315 = vsel %vm312, %v309, %v311
        %319 = vrot.lane.b32.xlu0 %v293, 126
        %v320 = vpop.permute.xlu0 %319
        %321 = vrot.lane.b32.xlu0 %v294, 126
        %v322 = vpop.permute.xlu0 %321
        %323 = vrot.lane.b32.xlu0 %v295, 126
        %v324 = vpop.permute.xlu0 %323
        %325 = vrot.lane.b32.xlu0 %v303, 126
        %v326 = vpop.permute.xlu0 %325
        %vm327 = vcmask 1031168
        %v328 = vsel %vm327, %v320, %v322
        %v329 = vsel %vm327, %v322, %v324
        %v330 = vsel %vm327, %v324, %v326
        %334 = vrot.lane.b32.xlu0 %v293, 110
        %v335 = vpop.permute.xlu0 %334
        %336 = vrot.lane.b32.xlu0 %v294, 110
        %v337 = vpop.permute.xlu0 %336
        %338 = vrot.lane.b32.xlu0 %v295, 110
        %v339 = vpop.permute.xlu0 %338
        %340 = vrot.lane.b32.xlu0 %v303, 110
        %v341 = vpop.permute.xlu0 %340
        %vm342 = vcmask 900096
        %v343 = vsel %vm342, %v335, %v337
        %v344 = vsel %vm342, %v337, %v339
        %v345 = vsel %vm342, %v339, %v341
        %349 = vrot.lane.b32.xlu0 %v293, 109
        %v350 = vpop.permute.xlu0 %349
        %351 = vrot.lane.b32.xlu0 %v294, 109
        %v352 = vpop.permute.xlu0 %351
        %353 = vrot.lane.b32.xlu0 %v295, 109
        %v354 = vpop.permute.xlu0 %353
        %355 = vrot.lane.b32.xlu0 %v303, 109
        %v356 = vpop.permute.xlu0 %355
        %vm357 = vcmask 891904
        %v358 = vsel %vm357, %v350, %v352
        %v359 = vsel %vm357, %v352, %v354
        %v360 = vsel %vm357, %v354, %v356
        %364 = vrot.lane.b32.xlu0 %v293, 108
        %v365 = vpop.permute.xlu0 %364
        %366 = vrot.lane.b32.xlu0 %v294, 108
        %v367 = vpop.permute.xlu0 %366
        %368 = vrot.lane.b32.xlu0 %v295, 108
        %v369 = vpop.permute.xlu0 %368
        %370 = vrot.lane.b32.xlu0 %v303, 108
        %v371 = vpop.permute.xlu0 %370
        %vm372 = vcmask 883712
        %v373 = vsel %vm372, %v365, %v367
        %v374 = vsel %vm372, %v367, %v369
        %v375 = vsel %vm372, %v369, %v371
        %379 = vrot.lane.b32.xlu0 %v293, 92
        %v380 = vpop.permute.xlu0 %379
        %381 = vrot.lane.b32.xlu0 %v294, 92
        %v382 = vpop.permute.xlu0 %381
        %383 = vrot.lane.b32.xlu0 %v295, 92
        %v384 = vpop.permute.xlu0 %383
        %385 = vrot.lane.b32.xlu0 %v303, 92
        %v386 = vpop.permute.xlu0 %385
        %vm387 = vcmask 752640
        %v388 = vsel %vm387, %v380, %v382
        %v389 = vsel %vm387, %v382, %v384
        %v390 = vsel %vm387, %v384, %v386
        %394 = vrot.lane.b32.xlu0 %v293, 91
        %v395 = vpop.permute.xlu0 %394
        %396 = vrot.lane.b32.xlu0 %v294, 91
        %v397 = vpop.permute.xlu0 %396
        %398 = vrot.lane.b32.xlu0 %v295, 91
        %v399 = vpop.permute.xlu0 %398
        %400 = vrot.lane.b32.xlu0 %v303, 91
        %v401 = vpop.permute.xlu0 %400
        %vm402 = vcmask 744448
        %v403 = vsel %vm402, %v395, %v397
        %v404 = vsel %vm402, %v397, %v399
        %v405 = vsel %vm402, %v399, %v401
        %409 = vrot.lane.b32.xlu0 %v293, 90
        %v410 = vpop.permute.xlu0 %409
        %411 = vrot.lane.b32.xlu0 %v294, 90
        %v412 = vpop.permute.xlu0 %411
        %413 = vrot.lane.b32.xlu0 %v295, 90
        %v414 = vpop.permute.xlu0 %413
        %415 = vrot.lane.b32.xlu0 %v303, 90
        %v416 = vpop.permute.xlu0 %415
        %vm417 = vcmask 736256
        %v418 = vsel %vm417, %v410, %v412
        %v419 = vsel %vm417, %v412, %v414
        %v420 = vsel %vm417, %v414, %v416
        %v424 = vld [vmem:[%s0] sm:$0xff]
        %v425 = vld [vmem:[%s0 + $0x8] sm:$0xff]
        %v426 = vld [vmem:[%s1] sm:$0xff]
        %v427 = vld [vmem:[%s1 + $0x8] sm:$0xff]
        %429 = vset.pattern.permute.xlu0 0
        %430 = vperm.xlu0 %429, %v426
        %v431 = vpop.permute.xlu0 %430
        %434 = vset.pattern.permute.xlu0 0
        %435 = vperm.xlu0 %434, %v427
        %v436 = vpop.permute.xlu0 %435
        %v440 = vunpack.c.l.b16 %v424
        %v441 = vunpack.c.h.b16 %v424
        %v442 = vunpack.c.l.b16 %v425
        %v443 = vunpack.c.h.b16 %v425
        %v444 = vpack.c.b16 %v442, %v440
        %v445 = vpack.c.b16 %v443, %v441
        %vm447 = vcmask 130048
        %v449 = vsel %vm447, %v445, 0
        %451 = vmatprep.subr.bf16.mxu0 %v404
        %452 = vmatpush1.bf16.msra.mxu0 %v403
        %453 = vmatprep.subr.bf16.mxu0 %v389
        %454 = vmatpush1.bf16.msra.mxu0 %v388
        %455 = vmatprep.subr.bf16.mxu0 %v374
        %456 = vmatpush1.bf16.msra.mxu0 %v373
        %457 = vmatprep.subr.bf16.mxu0 %v359
        %458 = vmatpush1.bf16.msra.mxu0 %v358
        %459 = vmatprep.subr.bf16.mxu0 %v344
        %460 = vmatpush1.bf16.msra.mxu0 %v343
        %461 = vmatprep.subr.bf16.mxu0 %v329
        %462 = vmatpush1.bf16.msra.mxu0 %v328
        %463 = vmatprep.subr.bf16.mxu0 %v314
        %464 = vmatpush1.bf16.msra.mxu0 %v313
        %465 = vmatprep.subr.bf16.mxu0 %v294
        %466 = vmatpush1.bf16.msra.mxu0 %v293
        %467 = vmatprep.subr.bf16.mxu0 0
        %468 = vmatpush2.bf16.msra.mxu0 0
        %469 = vmatprep.subr.bf16.mxu0 0
        %470 = vmatpush2.bf16.msra.mxu0 0
        %471 = vmatprep.subr.bf16.mxu0 0
        %472 = vmatpush2.bf16.msra.mxu0 0
        %473 = vmatprep.subr.bf16.mxu0 0
        %474 = vmatpush2.bf16.msra.mxu0 0
        %475 = vmatprep.subr.bf16.mxu0 0
        %476 = vmatpush2.bf16.msra.mxu0 0
        %477 = vmatprep.subr.bf16.mxu0 0
        %478 = vmatpush2.bf16.msra.mxu0 0
        %479 = vmatprep.subr.bf16.mxu0 0
        %480 = vmatpush2.bf16.msra.mxu0 0
        %481 = vmatprep.subr.bf16.mxu0 %v419
        %482 = vmatpush2.bf16.msra.mxu0 %v418
        %483 = vmatprep.mubr.bf16.mxu0 %v449
        %484 = vmatmul.mubr.bf16.gmra.mxu0 %v444
        %v485 = vpop.f32.mrf.mxu0
        %v486 = vadd.f32 %v431, %v485
        %v487 = vpop.f32.mrf.mxu0
        %v488 = vadd.f32 %v431, %v487
        %v489 = vpop.f32.mrf.mxu0
        %v490 = vadd.f32 %v436, %v489
        %v491 = vpop.f32.mrf.mxu0
        %v492 = vadd.f32 %v436, %v491
        %493 = vdwg.mxu0
        %494 = vmatprep.subr.bf16.mxu0 0
        %495 = vmatpush1.bf16.msra.mxu0 %v405
        %496 = vmatprep.subr.bf16.mxu0 0
        %497 = vmatpush1.bf16.msra.mxu0 %v390
        %498 = vmatprep.subr.bf16.mxu0 0
        %499 = vmatpush1.bf16.msra.mxu0 %v375
        %500 = vmatprep.subr.bf16.mxu0 0
        %501 = vmatpush1.bf16.msra.mxu0 %v360
        %502 = vmatprep.subr.bf16.mxu0 0
        %503 = vmatpush1.bf16.msra.mxu0 %v345
        %504 = vmatprep.subr.bf16.mxu0 0
        %505 = vmatpush1.bf16.msra.mxu0 %v330
        %506 = vmatprep.subr.bf16.mxu0 0
        %507 = vmatpush1.bf16.msra.mxu0 %v315
        %508 = vmatprep.subr.bf16.mxu0 0
        %509 = vmatpush1.bf16.msra.mxu0 %v295
        %510 = vmatprep.subr.bf16.mxu0 0
        %511 = vmatpush2.bf16.msra.mxu0 0
        %512 = vmatprep.subr.bf16.mxu0 0
        %513 = vmatpush2.bf16.msra.mxu0 0
        %514 = vmatprep.subr.bf16.mxu0 0
        %515 = vmatpush2.bf16.msra.mxu0 0
        %516 = vmatprep.subr.bf16.mxu0 0
        %517 = vmatpush2.bf16.msra.mxu0 0
        %518 = vmatprep.subr.bf16.mxu0 0
        %519 = vmatpush2.bf16.msra.mxu0 0
        %520 = vmatprep.subr.bf16.mxu0 0
        %521 = vmatpush2.bf16.msra.mxu0 0
        %522 = vmatprep.subr.bf16.mxu0 0
        %523 = vmatpush2.bf16.msra.mxu0 0
        %524 = vmatprep.subr.bf16.mxu0 0
        %525 = vmatpush2.bf16.msra.mxu0 %v420
        %526 = vmatprep.mubr.bf16.mxu0 %v449
        %527 = vmatmul.mubr.bf16.gmra.mxu0 %v444
        %v528 = vpop.f32.mrf.mxu0
        %v529 = vadd.f32 %v431, %v528
        %v530 = vpop.f32.mrf.mxu0
        %v531 = vpop.f32.mrf.mxu0
        %v532 = vadd.f32 %v436, %v531
        %v533 = vpop.f32.mrf.mxu0
        %534 = vdwg.mxu0
        %v535 = vmax.f32 %v486, 0.0
        %v536 = vmax.f32 %v488, 0.0
        %v537 = vmax.f32 %v529, 0.0
        %v538 = vmax.f32 %v490, 0.0
        %v539 = vmax.f32 %v492, 0.0
        %v540 = vmax.f32 %v532, 0.0
        %541 = vst [vmem:[%s267] sm:$0xff] %v535
        %542 = vst [vmem:[%s267 + $0x8] sm:$0xff] %v536
        %543 = vst [vmem:[%s267 + $0x10] sm:$0xff] %v537
        %544 = vst [vmem:[%s267 + $0x18] sm:$0xff] %v538
        %545 = vst [vmem:[%s267 + $0x20] sm:$0xff] %v539
        %546 = vst [vmem:[%s267 + $0x28] sm:$0xff] %v540
        %s547 = sand.u32 %s130, 1
        %s548 = scalar_lea.sflag [#allocation4], %s547
        %s549 = sand.u32 %s130, 1
        %s550 = smul.addr %s549, 48
        %s551 = scalar_lea.vmem [#allocation7], %s550
        // Predicated region
        $region45: #{tpu_custom_call.1} parent=35 // pred_check
          %p552 = pneg %p140
        $region46: #{tpu_custom_call.1} parent=35 // pred_check_branch
          %554 = sbr.rel (%p552) target = $region48
        $region47: #{tpu_custom_call.1} parent=35 // pred_region
          %s555 = smul.u32 3, %s24
          %s557 = ssub.s32 768, 768
          %558 = vsyncadd %s548, %s557
          %s559 = smul.addr %s555, 128
          %s560 = scalar_lea.hbm %s4, %s559
          %s561 = sshll.u32 %s551, 4
          %s562 = int_to_ptr.vmem [resolvable:$true] %s561
          %567 = dma.vmem_to_hbm [thread:$0]  %s562, 768, %s560, %s548, 384, 768, 24
        $region48: #{tpu_custom_call.1} parent=35 // pred_fallthru
          _
      $region36: #{tpu_custom_call.1} parent=5 // pred_fallthru
        _
      %p568 = scmp.le.s32.totalorder 2, %s19
      // Predicated region
      $region49: #{tpu_custom_call.1} parent=5 // pred_check
        %p569 = pneg %p568
      $region50: #{tpu_custom_call.1} parent=5 // pred_check_branch
        %571 = sbr.rel (%p569) target = $region52
      $region51: #{tpu_custom_call.1} parent=5 // pred_region
        %s572 = ssub.s32 %s19, 2
        // Predicated region
        $region53: #{tpu_custom_call.1} parent=51 // pred_check
          %p573 = pneg %p146
        $region54: #{tpu_custom_call.1} parent=51 // pred_check_branch
          %575 = sbr.rel (%p573) target = $region56
        $region55: #{tpu_custom_call.1} parent=51 // pred_region
          %s576 = sand.u32 %s131, 1
          %s577 = scalar_lea.sflag [#allocation4], %s576
          %s578 = sand.u32 %s131, 1
          %s579 = smul.addr %s578, 48
          %s580 = scalar_lea.vmem [#allocation7], %s579
          %581 = dma.done %s577, 768
        $region56: #{tpu_custom_call.1} parent=51 // pred_fallthru
          _
      $region52: #{tpu_custom_call.1} parent=5 // pred_fallthru
        _
    $region6: #{tpu_custom_call.1} parent=1 // loop_footer
      %s23 = sadd.s32 1, %s19
    $region7: #{tpu_custom_call.1} parent=1 // loop_footer_branch
      %18 = sbr.rel target = $region3
    $region8: #{tpu_custom_call.1} parent=1 // loop_exit
      _
    %582 = vsyncpa [#allocation3], 1
    %s583 = scalar_lea.sflag [#allocation3], 1
    %584 = vsyncpa %s583, 1
    %585 = vsyncpa [#allocation6], 1
    %s586 = scalar_lea.sflag [#allocation6], 1
    %587 = vsyncpa %s586, 1
    %588 = vsyncpa [#allocation4], 1
    %s589 = scalar_lea.sflag [#allocation4], 1
    %590 = vsyncpa %s589, 1

// kernel: tpu_custom_call.1
$region0: #{tpu_custom_call.1}
  #allocation0 [shape = 'u32[]', space=smem, size = 0x4, offset = 0x4, fixed_abs, tag = 'smem constant byte address 0x4 - core index']
  #allocation1 [shape = 'u32[144,128]{1,0:T(1,128)}', space=vmem, size = 0x12000, scoped, tag = 'internal scratch']
  %s0 = inlined_call_operand.vmem [shape: bf16[16,144], index: 0, kind: input, shape index: {}]
  %s1 = inlined_call_operand.vmem [shape: f32[16,1], index: 1, kind: input, shape index: {}]
  %s2 = inlined_call_operand.hbm [shape: bf16[16,896], index: 2, kind: input, shape index: {}]
  %s3 = inlined_call_operand.hbm [shape: bf16[16,896], index: 3, kind: input, shape index: {}]
  %s4 = inlined_call_operand.hbm [shape: f32[16,768], index: 4, kind: output, shape index: {}]
  %s5 = sld [smem:[#allocation0]]
  $region57: #{tpu_custom_call.1} parent=0
    _
  %s7 = ssub.s32 1, %s5
  %s8 = scalar_select 0, %s7, %s5
  $region1: #{tpu_custom_call.1} parent=0
    #allocation2 [shape = 'u8[24576]{0}', space=vmem, size = 0x6000, scoped, tag = 'input window, operand 2']
    #allocation3 [shape = 's32[2]{0}', space=sflag, size = 0x8, scoped, tag = 'scoped memory for tpu_custom_call.1']
    #allocation4 [shape = 's32[2]{0}', space=sflag, size = 0x8, scoped, tag = 'scoped memory for tpu_custom_call.1']
    #allocation5 [shape = 'u8[8192]{0}', space=vmem, size = 0x2000, scoped, tag = 'input window, operand 3']
    #allocation6 [shape = 's32[2]{0}', space=sflag, size = 0x8, scoped, tag = 'scoped memory for tpu_custom_call.1']
    #allocation7 [shape = 'u8[49152]{0}', space=vmem, size = 0xc000, scoped, tag = 'output window, operand 0']
    %9 = vsyncpa [#allocation3], 0
    %s10 = scalar_lea.sflag [#allocation3], 1
    %11 = vsyncpa %s10, 0
    %12 = vsyncpa [#allocation6], 0
    %s13 = scalar_lea.sflag [#allocation6], 1
    %14 = vsyncpa %s13, 0
    %15 = vsyncpa [#allocation4], 0
    %s16 = scalar_lea.sflag [#allocation4], 1
    %17 = vsyncpa %s16, 0
    loop: start=0, step=1, limit=4
    $region2: #{tpu_custom_call.1} parent=1 // loop_pre_header
      _
    $region3: #{tpu_custom_call.1} parent=1 // loop_header
      %s19 = sphi 0, %s23
      %p20 = scmp.ge.s32.totalorder %s19, 4
      %s27 = sphi 0, %s27
      %s29 = sphi 0, %s27
      %s30 = sphi 0, %s29
      %s44 = sphi 0, %s30
      %s48 = sphi 0, %s48
      %s50 = sphi 0, %s48
      %s51 = sphi 0, %s50
      %s65 = sphi 0, %s51
      %s71 = sphi 0, %s73
      %s74 = sphi 0, %s71
      %s75 = sphi 0, %s74
      %s91 = sphi 0, %s75
      %s101 = sphi 0, %s103
      %s104 = sphi 0, %s101
      %s105 = sphi 0, %s104
      %s121 = sphi 0, %s105
      %s127 = sphi 0, %s129
      %s130 = sphi 0, %s127
      %s131 = sphi 0, %s130
      %s147 = sphi 0, %s131
    $region4: #{tpu_custom_call.1} parent=1 // loop_header_branch
      %22 = sbr.rel (%p20) target = $region8
    $region5: #{tpu_custom_call.1} parent=1 // loop_body
      %s24 = ssub.s32 %s19, 1
      %s25 = ssub.s32 %s19, 2
      %s26 = sadd.s32 %s19, 1
      %s28 = sadd.s32 %s27, 1
      %p31 = scmp.eq.s32.totalorder %s19, 1
      %p32 = scmp.ne.s32.totalorder %s27, %s29
      %p33 = scmp.eq.s32.totalorder %s19, 0
      %p34 = por %p32, %p33
      %p35 = scmp.ne.s32.totalorder %s27, %s29
      %p36 = scmp.eq.s32.totalorder %s24, 1
      %p37 = por %p35, %p36
      %p38 = scmp.ne.s32.totalorder %s29, %s30
      %p39 = scmp.eq.s32.totalorder %s24, 0
      %p40 = por %p38, %p39
      %p41 = scmp.ne.s32.totalorder %s29, %s30
      %p42 = scmp.eq.s32.totalorder %s25, 1
      %p43 = por %p41, %p42
      %p45 = scmp.ne.s32.totalorder %s30, %s44
      %p46 = scmp.eq.s32.totalorder %s25, 0
      %p47 = por %p45, %p46
      %s49 = sadd.s32 %s48, 1
      %p52 = scmp.eq.s32.totalorder %s19, 1
      %p53 = scmp.ne.s32.totalorder %s48, %s50
      %p54 = scmp.eq.s32.totalorder %s19, 0
      %p55 = por %p53, %p54
      %p56 = scmp.ne.s32.totalorder %s48, %s50
      %p57 = scmp.eq.s32.totalorder %s24, 1
      %p58 = por %p56, %p57
      %p59 = scmp.ne.s32.totalorder %s50, %s51
      %p60 = scmp.eq.s32.totalorder %s24, 0
      %p61 = por %p59, %p60
      %p62 = scmp.ne.s32.totalorder %s50, %s51
      %p63 = scmp.eq.s32.totalorder %s25, 1
      %p64 = por %p62, %p63
      %p66 = scmp.ne.s32.totalorder %s51, %s65
      %p67 = scmp.eq.s32.totalorder %s25, 0
      %p68 = por %p66, %p67
      %s69 = ssub.s32 %s19, %s26
      %p70 = scmp.eq.s32.totalorder %s69, 0
      %s72 = sadd.s32 %s71, 1
      %s73 = scalar_select %p70, %s71, %s72
      %p76 = pneg %p70
      %p77 = scmp.eq.s32.totalorder %s19, 1
      %p78 = por %p76, %p77
      %p79 = scmp.ne.s32.totalorder %s71, %s74
      %p80 = scmp.eq.s32.totalorder %s19, 0
      %p81 = por %p79, %p80
      %p82 = scmp.ne.s32.totalorder %s71, %s74
      %p83 = scmp.eq.s32.totalorder %s24, 1
      %p84 = por %p82, %p83
      %p85 = scmp.ne.s32.totalorder %s74, %s75
      %p86 = scmp.eq.s32.totalorder %s24, 0
      %p87 = por %p85, %p86
      %p88 = scmp.ne.s32.totalorder %s74, %s75
      %p89 = scmp.eq.s32.totalorder %s25, 1
      %p90 = por %p88, %p89
      %p92 = scmp.ne.s32.totalorder %s75, %s91
      %p93 = scmp.eq.s32.totalorder %s25, 0
      %p94 = por %p92, %p93
      %s95 = sadd.s32 %s19, 1
      %s96 = smul.u32 %s95, 3
      %s97 = sadd.s32 %s26, 1
      %s98 = smul.u32 %s97, 3
      %s99 = ssub.s32 %s96, %s98
      %p100 = scmp.eq.s32.totalorder %s99, 0
      %s102 = sadd.s32 %s101, 1
      %s103 = scalar_select %p100, %s101, %s102
      %p106 = pneg %p100
      %p107 = scmp.eq.s32.totalorder %s19, 1
      %p108 = por %p106, %p107
      %p109 = scmp.ne.s32.totalorder %s101, %s104
      %p110 = scmp.eq.s32.totalorder %s19, 0
      %p111 = por %p109, %p110
      %p112 = scmp.ne.s32.totalorder %s101, %s104
      %p113 = scmp.eq.s32.totalorder %s24, 1
      %p114 = por %p112, %p113
      %p115 = scmp.ne.s32.totalorder %s104, %s105
      %p116 = scmp.eq.s32.totalorder %s24, 0
      %p117 = por %p115, %p116
      %p118 = scmp.ne.s32.totalorder %s104, %s105
      %p119 = scmp.eq.s32.totalorder %s25, 1
      %p120 = por %p118, %p119
      %p122 = scmp.ne.s32.totalorder %s105, %s121
      %p123 = scmp.eq.s32.totalorder %s25, 0
      %p124 = por %p122, %p123
      %s125 = ssub.s32 %s19, %s26
      %p126 = scmp.eq.s32.totalorder %s125, 0
      %s128 = sadd.s32 %s127, 1
      %s129 = scalar_select %p126, %s127, %s128
      %p132 = pneg %p126
      %p133 = scmp.eq.s32.totalorder %s19, 1
      %p134 = por %p132, %p133
      %p135 = scmp.ne.s32.totalorder %s127, %s130
      %p136 = scmp.eq.s32.totalorder %s19, 0
      %p137 = por %p135, %p136
      %p138 = scmp.ne.s32.totalorder %s127, %s130
      %p139 = scmp.eq.s32.totalorder %s24, 1
      %p140 = por %p138, %p139
      %p141 = scmp.ne.s32.totalorder %s130, %s131
      %p142 = scmp.eq.s32.totalorder %s24, 0
      %p143 = por %p141, %p142
      %p144 = scmp.ne.s32.totalorder %s130, %s131
      %p145 = scmp.eq.s32.totalorder %s25, 1
      %p146 = por %p144, %p145
      %p148 = scmp.ne.s32.totalorder %s131, %s147
      %p149 = scmp.eq.s32.totalorder %s25, 0
      %p150 = por %p148, %p149
      %p151 = scmp.le.s32.totalorder 1, %s19
      %p152 = scmp.lt.s32.totalorder %s19, 3
      %p153 = pnand %p151, %p152
      %p154 = pneg %p153
      // Predicated region
      $region9: #{tpu_custom_call.1} parent=5 // pred_check
        _
      $region10: #{tpu_custom_call.1} parent=5 // pred_check_branch
        %156 = sbr.rel (%p153) target = $region12
      $region11: #{tpu_custom_call.1} parent=5 // pred_region
        %s157 = ssub.s32 %s19, 1
        // Predicated region
        $region13: #{tpu_custom_call.1} parent=11 // pred_check
          %p158 = pneg %p40
        $region14: #{tpu_custom_call.1} parent=11 // pred_check_branch
          %160 = sbr.rel (%p158) target = $region16
        $region15: #{tpu_custom_call.1} parent=11 // pred_region
          _
        $region16: #{tpu_custom_call.1} parent=11 // pred_fallthru
          _
        // Predicated region
        $region17: #{tpu_custom_call.1} parent=11 // pred_check
          %p161 = pneg %p61
        $region18: #{tpu_custom_call.1} parent=11 // pred_check_branch
          %163 = sbr.rel (%p161) target = $region20
        $region19: #{tpu_custom_call.1} parent=11 // pred_region
          _
        $region20: #{tpu_custom_call.1} parent=11 // pred_fallthru
          _
      $region12: #{tpu_custom_call.1} parent=5 // pred_fallthru
        _
      %p164 = scmp.lt.s32.totalorder %s19, 2
      // Predicated region
      $region21: #{tpu_custom_call.1} parent=5 // pred_check
        %p165 = pneg %p164
      $region22: #{tpu_custom_call.1} parent=5 // pred_check_branch
        %167 = sbr.rel (%p165) target = $region24
      $region23: #{tpu_custom_call.1} parent=5 // pred_region
        // Predicated region
        $region25: #{tpu_custom_call.1} parent=23 // pred_check
          %p168 = pneg %p81
        $region26: #{tpu_custom_call.1} parent=23 // pred_check_branch
          %170 = sbr.rel (%p168) target = $region28
        $region27: #{tpu_custom_call.1} parent=23 // pred_region
          %s171 = sand.u32 %s71, 1
          %s172 = scalar_lea.sflag [#allocation3], %s171
          %s173 = sand.u32 %s71, 1
          %s174 = smul.addr %s173, 24
          %s175 = scalar_lea.vmem [#allocation2], %s174
          %s176 = smul.u32 3, %s19
          %s177 = ssub.s32 7, %s176
          %p178 = scmp.lt.s32.totalorder %s177, 3
          %s179 = scalar_select %p178, %s177, 3
          %s180 = smul.u32 128, %s179
          %s182 = ssub.s32 384, %s180
          %183 = vsyncadd %s172, %s182
          %p184 = scmp.ne.s32.totalorder 0, %s180
          %s185 = smul.addr %s176, 64
          %s186 = scalar_lea.hbm %s2, %s185
          %s187 = smul.u32 %s179, 4
          %s188 = smul.u32 %s187, 2
          %s189 = sshll.u32 %s175, 4
          %s190 = int_to_ptr.vmem [resolvable:$true] %s189
          %s191 = sshll.u32 %s188, 4
          %195 = dma.hbm_to_vmem [thread:$0]  (%p184), %s186, %s191, %s190, %s172, 448, 192, %s187
        $region28: #{tpu_custom_call.1} parent=23 // pred_fallthru
          _
        // Predicated region
        $region29: #{tpu_custom_call.1} parent=23 // pred_check
          %p196 = pneg %p111
        $region30: #{tpu_custom_call.1} parent=23 // pred_check_branch
          %198 = sbr.rel (%p196) target = $region32
        $region31: #{tpu_custom_call.1} parent=23 // pred_region
          %s199 = sand.u32 %s101, 1
          %s200 = scalar_lea.sflag [#allocation6], %s199
          %s201 = sand.u32 %s101, 1
          %s202 = smul.addr %s201, 8
          %s203 = scalar_lea.vmem [#allocation5], %s202
          %s204 = sadd.s32 %s19, 1
          %s205 = smul.u32 %s204, 3
          %s207 = ssub.s32 128, 128
          %208 = vsyncadd %s200, %s207
          %s209 = smul.addr %s205, 64
          %s210 = scalar_lea.hbm %s3, %s209
          %s211 = sshll.u32 %s203, 4
          %s212 = int_to_ptr.vmem [resolvable:$true] %s211
          %217 = dma.hbm_to_vmem [thread:$0]  %s210, 128, %s212, %s200, 448, 64, 4
        $region32: #{tpu_custom_call.1} parent=23 // pred_fallthru
          _
      $region24: #{tpu_custom_call.1} parent=5 // pred_fallthru
        _
      %p218 = scmp.le.s32.totalorder 1, %s19
      %p219 = scmp.lt.s32.totalorder %s19, 3
      %p220 = pnand %p218, %p219
      %p221 = pneg %p220
      // Predicated region
      $region33: #{tpu_custom_call.1} parent=5 // pred_check
        _
      $region34: #{tpu_custom_call.1} parent=5 // pred_check_branch
        %223 = sbr.rel (%p220) target = $region36
      $region35: #{tpu_custom_call.1} parent=5 // pred_region
        %s224 = ssub.s32 %s19, 1
        %s225 = sand.u32 %s74, 1
        %s226 = scalar_lea.sflag [#allocation3], %s225
        %s227 = sand.u32 %s74, 1
        %s228 = smul.addr %s227, 24
        %s229 = scalar_lea.vmem [#allocation2], %s228
        // Predicated region
        $region37: #{tpu_custom_call.1} parent=35 // pred_check
          %p230 = pneg %p87
        $region38: #{tpu_custom_call.1} parent=35 // pred_check_branch
          %232 = sbr.rel (%p230) target = $region40
        $region39: #{tpu_custom_call.1} parent=35 // pred_region
          %233 = dma.done %s226, 384
        $region40: #{tpu_custom_call.1} parent=35 // pred_fallthru
          _
        %s234 = sand.u32 %s104, 1
        %s235 = scalar_lea.sflag [#allocation6], %s234
        %s236 = sand.u32 %s104, 1
        %s237 = smul.addr %s236, 8
        %s238 = scalar_lea.vmem [#allocation5], %s237
        // Predicated region
        $region41: #{tpu_custom_call.1} parent=35 // pred_check
          %p239 = pneg %p117
        $region42: #{tpu_custom_call.1} parent=35 // pred_check_branch
          %241 = sbr.rel (%p239) target = $region44
        $region43: #{tpu_custom_call.1} parent=35 // pred_region
          %242 = dma.done %s235, 128
        $region44: #{tpu_custom_call.1} parent=35 // pred_fallthru
          _
        %p243 = pneg %p40
        %p244 = pneg %p37
        %p245 = pneg %p61
        %p246 = pneg %p58
        %s247 = sand.u32 %s74, 1
        %s248 = scalar_lea.sflag [#allocation3], %s247
        %s249 = sand.u32 %s74, 1
        %s250 = smul.addr %s249, 24
        %s251 = scalar_lea.vmem [#allocation2], %s250
        %p252 = pneg %p87
        %p253 = pneg %p84
        %s254 = sand.u32 %s104, 1
        %s255 = scalar_lea.sflag [#allocation6], %s254
        %s256 = sand.u32 %s104, 1
        %s257 = smul.addr %s256, 8
        %s258 = scalar_lea.vmem [#allocation5], %s257
        %p259 = pneg %p117
        %p260 = pneg %p114
        %p261 = pneg %p143
        %p262 = pneg %p140
        %s263 = sand.u32 %s130, 1
        %s264 = scalar_lea.sflag [#allocation4], %s263
        %s265 = sand.u32 %s130, 1
        %s266 = smul.addr %s265, 48
        %s267 = scalar_lea.vmem [#allocation7], %s266
        %s268 = smul.u32 3, %s24
        %s269 = ssub.s32 7, %s268
        %p270 = scmp.lt.s32.totalorder %s269, 3
        %s271 = scalar_select %p270, %s269, 3
        %s272 = smul.u32 128, %s271
        %s273 = sadd.s32 %s24, 1
        %s274 = smul.u32 %s273, 3
        %s275 = smul.u32 3, %s24
        %v277 = vld [vmem:[%s229] sm:$0xff]
        %v278 = vld [vmem:[%s229 + $0x8] sm:$0xf]
        %v279 = vld [vmem:[%s229 + $0xc] sm:$0xff]
        %v280 = vld [vmem:[%s229 + $0x14] sm:$0xf]
        %v281 = vld [vmem:[%s238] sm:$0xf]
        %v282 = vld [vmem:[%s238 + $0x4] sm:$0xf]
        %v287 = vunpack.c.l.b16 %v277
        %v288 = vunpack.c.h.b16 %v277
        %v289 = vunpack.c.l.b16 %v278
        %v290 = vunpack.c.l.b16 %v279
        %v291 = vunpack.c.h.b16 %v279
        %v292 = vunpack.c.l.b16 %v280
        %v293 = vpack.c.b16 %v290, %v287
        %v294 = vpack.c.b16 %v291, %v288
        %v295 = vpack.c.b16 %v292, %v289
        %v301 = vunpack.c.l.b16 %v281
        %v302 = vunpack.c.l.b16 %v282
        %v303 = vpack.c.b16 %v302, %v301
        %304 = vrot.lane.b32.xlu0 %v293, 127
        %v305 = vpop.permute.xlu0 %304
        %306 = vrot.lane.b32.xlu0 %v294, 127
        %v307 = vpop.permute.xlu0 %306
        %308 = vrot.lane.b32.xlu0 %v295, 127
        %v309 = vpop.permute.xlu0 %308
        %310 = vrot.lane.b32.xlu0 %v303, 127
        %v311 = vpop.permute.xlu0 %310
        %vm312 = vcmask 1039360
        %v313 = vsel %vm312, %v305, %v307
        %v314 = vsel %vm312, %v307, %v309
        %v315 = vsel %vm312, %v309, %v311
        %319 = vrot.lane.b32.xlu0 %v293, 126
        %v320 = vpop.permute.xlu0 %319
        %321 = vrot.lane.b32.xlu0 %v294, 126
        %v322 = vpop.permute.xlu0 %321
        %323 = vrot.lane.b32.xlu0 %v295, 126
        %v324 = vpop.permute.xlu0 %323
        %325 = vrot.lane.b32.xlu0 %v303, 126
        %v326 = vpop.permute.xlu0 %325
        %vm327 = vcmask 1031168
        %v328 = vsel %vm327, %v320, %v322
        %v329 = vsel %vm327, %v322, %v324
        %v330 = vsel %vm327, %v324, %v326
        %334 = vrot.lane.b32.xlu0 %v293, 110
        %v335 = vpop.permute.xlu0 %334
        %336 = vrot.lane.b32.xlu0 %v294, 110
        %v337 = vpop.permute.xlu0 %336
        %338 = vrot.lane.b32.xlu0 %v295, 110
        %v339 = vpop.permute.xlu0 %338
        %340 = vrot.lane.b32.xlu0 %v303, 110
        %v341 = vpop.permute.xlu0 %340
        %vm342 = vcmask 900096
        %v343 = vsel %vm342, %v335, %v337
        %v344 = vsel %vm342, %v337, %v339
        %v345 = vsel %vm342, %v339, %v341
        %349 = vrot.lane.b32.xlu0 %v293, 109
        %v350 = vpop.permute.xlu0 %349
        %351 = vrot.lane.b32.xlu0 %v294, 109
        %v352 = vpop.permute.xlu0 %351
        %353 = vrot.lane.b32.xlu0 %v295, 109
        %v354 = vpop.permute.xlu0 %353
        %355 = vrot.lane.b32.xlu0 %v303, 109
        %v356 = vpop.permute.xlu0 %355
        %vm357 = vcmask 891904
        %v358 = vsel %vm357, %v350, %v352
        %v359 = vsel %vm357, %v352, %v354
        %v360 = vsel %vm357, %v354, %v356
        %364 = vrot.lane.b32.xlu0 %v293, 108
        %v365 = vpop.permute.xlu0 %364
        %366 = vrot.lane.b32.xlu0 %v294, 108
        %v367 = vpop.permute.xlu0 %366
        %368 = vrot.lane.b32.xlu0 %v295, 108
        %v369 = vpop.permute.xlu0 %368
        %370 = vrot.lane.b32.xlu0 %v303, 108
        %v371 = vpop.permute.xlu0 %370
        %vm372 = vcmask 883712
        %v373 = vsel %vm372, %v365, %v367
        %v374 = vsel %vm372, %v367, %v369
        %v375 = vsel %vm372, %v369, %v371
        %379 = vrot.lane.b32.xlu0 %v293, 92
        %v380 = vpop.permute.xlu0 %379
        %381 = vrot.lane.b32.xlu0 %v294, 92
        %v382 = vpop.permute.xlu0 %381
        %383 = vrot.lane.b32.xlu0 %v295, 92
        %v384 = vpop.permute.xlu0 %383
        %385 = vrot.lane.b32.xlu0 %v303, 92
        %v386 = vpop.permute.xlu0 %385
        %vm387 = vcmask 752640
        %v388 = vsel %vm387, %v380, %v382
        %v389 = vsel %vm387, %v382, %v384
        %v390 = vsel %vm387, %v384, %v386
        %394 = vrot.lane.b32.xlu0 %v293, 91
        %v395 = vpop.permute.xlu0 %394
        %396 = vrot.lane.b32.xlu0 %v294, 91
        %v397 = vpop.permute.xlu0 %396
        %398 = vrot.lane.b32.xlu0 %v295, 91
        %v399 = vpop.permute.xlu0 %398
        %400 = vrot.lane.b32.xlu0 %v303, 91
        %v401 = vpop.permute.xlu0 %400
        %vm402 = vcmask 744448
        %v403 = vsel %vm402, %v395, %v397
        %v404 = vsel %vm402, %v397, %v399
        %v405 = vsel %vm402, %v399, %v401
        %409 = vrot.lane.b32.xlu0 %v293, 90
        %v410 = vpop.permute.xlu0 %409
        %411 = vrot.lane.b32.xlu0 %v294, 90
        %v412 = vpop.permute.xlu0 %411
        %413 = vrot.lane.b32.xlu0 %v295, 90
        %v414 = vpop.permute.xlu0 %413
        %415 = vrot.lane.b32.xlu0 %v303, 90
        %v416 = vpop.permute.xlu0 %415
        %vm417 = vcmask 736256
        %v418 = vsel %vm417, %v410, %v412
        %v419 = vsel %vm417, %v412, %v414
        %v420 = vsel %vm417, %v414, %v416
        %v424 = vld [vmem:[%s0] sm:$0xff]
        %v425 = vld [vmem:[%s0 + $0x8] sm:$0xff]
        %v426 = vld [vmem:[%s1] sm:$0xff]
        %v427 = vld [vmem:[%s1 + $0x8] sm:$0xff]
        %429 = vset.pattern.permute.xlu0 0
        %430 = vperm.xlu0 %429, %v426
        %v431 = vpop.permute.xlu0 %430
        %434 = vset.pattern.permute.xlu0 0
        %435 = vperm.xlu0 %434, %v427
        %v436 = vpop.permute.xlu0 %435
        %v440 = vunpack.c.l.b16 %v424
        %v441 = vunpack.c.h.b16 %v424
        %v442 = vunpack.c.l.b16 %v425
        %v443 = vunpack.c.h.b16 %v425
        %v444 = vpack.c.b16 %v442, %v440
        %v445 = vpack.c.b16 %v443, %v441
        %vm447 = vcmask 130048
        %v449 = vsel %vm447, %v445, 0
        %451 = vmatprep.subr.bf16.mxu0 %v404
        %452 = vmatpush1.bf16.msra.mxu0 %v403
        %453 = vmatprep.subr.bf16.mxu0 %v389
        %454 = vmatpush1.bf16.msra.mxu0 %v388
        %455 = vmatprep.subr.bf16.mxu0 %v374
        %456 = vmatpush1.bf16.msra.mxu0 %v373
        %457 = vmatprep.subr.bf16.mxu0 %v359
        %458 = vmatpush1.bf16.msra.mxu0 %v358
        %459 = vmatprep.subr.bf16.mxu0 %v344
        %460 = vmatpush1.bf16.msra.mxu0 %v343
        %461 = vmatprep.subr.bf16.mxu0 %v329
        %462 = vmatpush1.bf16.msra.mxu0 %v328
        %463 = vmatprep.subr.bf16.mxu0 %v314
        %464 = vmatpush1.bf16.msra.mxu0 %v313
        %465 = vmatprep.subr.bf16.mxu0 %v294
        %466 = vmatpush1.bf16.msra.mxu0 %v293
        %467 = vmatprep.subr.bf16.mxu0 0
        %468 = vmatpush2.bf16.msra.mxu0 0
        %469 = vmatprep.subr.bf16.mxu0 0
        %470 = vmatpush2.bf16.msra.mxu0 0
        %471 = vmatprep.subr.bf16.mxu0 0
        %472 = vmatpush2.bf16.msra.mxu0 0
        %473 = vmatprep.subr.bf16.mxu0 0
        %474 = vmatpush2.bf16.msra.mxu0 0
        %475 = vmatprep.subr.bf16.mxu0 0
        %476 = vmatpush2.bf16.msra.mxu0 0
        %477 = vmatprep.subr.bf16.mxu0 0
        %478 = vmatpush2.bf16.msra.mxu0 0
        %479 = vmatprep.subr.bf16.mxu0 0
        %480 = vmatpush2.bf16.msra.mxu0 0
        %481 = vmatprep.subr.bf16.mxu0 %v419
        %482 = vmatpush2.bf16.msra.mxu0 %v418
        %483 = vmatprep.mubr.bf16.mxu0 %v449
        %484 = vmatmul.mubr.bf16.gmra.mxu0 %v444
        %v485 = vpop.f32.mrf.mxu0
        %v486 = vadd.f32 %v431, %v485
        %v487 = vpop.f32.mrf.mxu0
        %v488 = vadd.f32 %v431, %v487
        %v489 = vpop.f32.mrf.mxu0
        %v490 = vadd.f32 %v436, %v489
        %v491 = vpop.f32.mrf.mxu0
        %v492 = vadd.f32 %v436, %v491
        %493 = vdwg.mxu0
        %494 = vmatprep.subr.bf16.mxu0 0
        %495 = vmatpush1.bf16.msra.mxu0 %v405
        %496 = vmatprep.subr.bf16.mxu0 0
        %497 = vmatpush1.bf16.msra.mxu0 %v390
        %498 = vmatprep.subr.bf16.mxu0 0
        %499 = vmatpush1.bf16.msra.mxu0 %v375
        %500 = vmatprep.subr.bf16.mxu0 0
        %501 = vmatpush1.bf16.msra.mxu0 %v360
        %502 = vmatprep.subr.bf16.mxu0 0
        %503 = vmatpush1.bf16.msra.mxu0 %v345
        %504 = vmatprep.subr.bf16.mxu0 0
        %505 = vmatpush1.bf16.msra.mxu0 %v330
        %506 = vmatprep.subr.bf16.mxu0 0
        %507 = vmatpush1.bf16.msra.mxu0 %v315
        %508 = vmatprep.subr.bf16.mxu0 0
        %509 = vmatpush1.bf16.msra.mxu0 %v295
        %510 = vmatprep.subr.bf16.mxu0 0
        %511 = vmatpush2.bf16.msra.mxu0 0
        %512 = vmatprep.subr.bf16.mxu0 0
        %513 = vmatpush2.bf16.msra.mxu0 0
        %514 = vmatprep.subr.bf16.mxu0 0
        %515 = vmatpush2.bf16.msra.mxu0 0
        %516 = vmatprep.subr.bf16.mxu0 0
        %517 = vmatpush2.bf16.msra.mxu0 0
        %518 = vmatprep.subr.bf16.mxu0 0
        %519 = vmatpush2.bf16.msra.mxu0 0
        %520 = vmatprep.subr.bf16.mxu0 0
        %521 = vmatpush2.bf16.msra.mxu0 0
        %522 = vmatprep.subr.bf16.mxu0 0
        %523 = vmatpush2.bf16.msra.mxu0 0
        %524 = vmatprep.subr.bf16.mxu0 0
        %525 = vmatpush2.bf16.msra.mxu0 %v420
        %526 = vmatprep.mubr.bf16.mxu0 %v449
        %527 = vmatmul.mubr.bf16.gmra.mxu0 %v444
        %v528 = vpop.f32.mrf.mxu0
        %v529 = vadd.f32 %v431, %v528
        %v530 = vpop.f32.mrf.mxu0
        %v531 = vpop.f32.mrf.mxu0
        %v532 = vadd.f32 %v436, %v531
        %v533 = vpop.f32.mrf.mxu0
        %534 = vdwg.mxu0
        %v535 = vmax.f32 %v486, 0.0
        %v536 = vmax.f32 %v488, 0.0
        %v537 = vmax.f32 %v529, 0.0
        %v538 = vmax.f32 %v490, 0.0
        %v539 = vmax.f32 %v492, 0.0
        %v540 = vmax.f32 %v532, 0.0
        %541 = vst [vmem:[%s267] sm:$0xff] %v535
        %542 = vst [vmem:[%s267 + $0x8] sm:$0xff] %v536
        %543 = vst [vmem:[%s267 + $0x10] sm:$0xff] %v537
        %544 = vst [vmem:[%s267 + $0x18] sm:$0xff] %v538
        %545 = vst [vmem:[%s267 + $0x20] sm:$0xff] %v539
        %546 = vst [vmem:[%s267 + $0x28] sm:$0xff] %v540
        %s547 = sand.u32 %s130, 1
        %s548 = scalar_lea.sflag [#allocation4], %s547
        %s549 = sand.u32 %s130, 1
        %s550 = smul.addr %s549, 48
        %s551 = scalar_lea.vmem [#allocation7], %s550
        // Predicated region
        $region45: #{tpu_custom_call.1} parent=35 // pred_check
          %p552 = pneg %p140
        $region46: #{tpu_custom_call.1} parent=35 // pred_check_branch
          %554 = sbr.rel (%p552) target = $region48
        $region47: #{tpu_custom_call.1} parent=35 // pred_region
          %s555 = smul.u32 3, %s24
          %s557 = ssub.s32 768, 768
          %558 = vsyncadd %s548, %s557
          %s559 = smul.addr %s555, 128
          %s560 = scalar_lea.hbm %s4, %s559
          %s561 = sshll.u32 %s551, 4
          %s562 = int_to_ptr.vmem [resolvable:$true] %s561
          %567 = dma.vmem_to_hbm [thread:$0]  %s562, 768, %s560, %s548, 384, 768, 24
        $region48: #{tpu_custom_call.1} parent=35 // pred_fallthru
          _
      $region36: #{tpu_custom_call.1} parent=5 // pred_fallthru
        _
      %p568 = scmp.le.s32.totalorder 2, %s19
      // Predicated region
      $region49: #{tpu_custom_call.1} parent=5 // pred_check
        %p569 = pneg %p568
      $region50: #{tpu_custom_call.1} parent=5 // pred_check_branch
        %571 = sbr.rel (%p569) target = $region52
      $region51: #{tpu_custom_call.1} parent=5 // pred_region
        %s572 = ssub.s32 %s19, 2
        // Predicated region
        $region53: #{tpu_custom_call.1} parent=51 // pred_check
          %p573 = pneg %p146
        $region54: #{tpu_custom_call.1} parent=51 // pred_check_branch
          %575 = sbr.rel (%p573) target = $region56
        $region55: #{tpu_custom_call.1} parent=51 // pred_region
          %s576 = sand.u32 %s131, 1
          %s577 = scalar_lea.sflag [#allocation4], %s576
          %s578 = sand.u32 %s131, 1
          %s579 = smul.addr %s578, 48
          %s580 = scalar_lea.vmem [#allocation7], %s579
          %581 = dma.done %s577, 768
        $region56: #{tpu_custom_call.1} parent=51 // pred_fallthru
          _
      $region52: #{tpu_custom_call.1} parent=5 // pred_fallthru
        _
    $region6: #{tpu_custom_call.1} parent=1 // loop_footer
      %s23 = sadd.s32 1, %s19
    $region7: #{tpu_custom_call.1} parent=1 // loop_footer_branch
      %18 = sbr.rel target = $region3
    $region8: #{tpu_custom_call.1} parent=1 // loop_exit
      _
    %582 = vsyncpa [#allocation3], 1
    %s583 = scalar_lea.sflag [#allocation3], 1
    %584 = vsyncpa %s583, 1
    %585 = vsyncpa [#allocation6], 1
    %s586 = scalar_lea.sflag [#allocation6], 1
    %587 = vsyncpa %s586, 1
    %588 = vsyncpa [#allocation4], 1
    %s589 = scalar_lea.sflag [#allocation4], 1
    %590 = vsyncpa %s589, 1

</llo_original>
